<compile_context>
chip_gen: v7x
topology: tpu7x:2x2x1
jax: 0.10.0
libtpu: 0.0.40
codegen_flags: <defaults>
</compile_context>

<pallas_src>
import functools

import jax
import jax.numpy as jnp
from jax import lax
from jax.experimental import pallas as pl
from jax.experimental.pallas import tpu as pltpu


def _cdiv(a, b):
    return -(-a // b)


def _round_up(a, b):
    return _cdiv(a, b) * b


def _bond_angle_kernel(x_ref, src_ref, m_ref, bsum_ref, out_ref, *,
                       mxu_dtype, atom_block, f_pad):
    """One (partial p, atom-column block nb, bond-angle row tile k) grid step.

    x_ref    : [tile, D+A+1]    packed rows [ba | gathered nbr | 1]   (mxu_dtype)
    src_ref  : [tile, 1]        destination atom index (-1 = pad)     (int32)
    m_ref    : [D+A+1, 2*F_pad] merged [[W,0],[0,rep],[bias,0]]       (mxu_dtype)
    bsum_ref : [F_pad, A]       0/1 block-sum matrix                  (mxu_dtype)
    out_ref  : [A, atom_block]  transposed partial output accumulator (f32)
    """
    nb = pl.program_id(1)
    k = pl.program_id(2)

    @pl.when(k == 0)
    def _():
        out_ref[...] = jnp.zeros_like(out_ref)

    # 1) single merged MXU pass: lanes [0:F_pad) = ba @ W + bias (bias folded
    #    via the ones column), lanes [F_pad:2*F_pad) = neighbour row replicated
    #    A times.  128-aligned static slices split the result.
    y = jnp.dot(x_ref[...], m_ref[...],
                preferred_element_type=jnp.float32)          # [tile, 2*F_pad]

    # 2) fused elementwise product (one temporary, cast in the same expression):
    #    prod[i, r*A + c] = ba_lin[i, r*A + c] * nbr[i, c]
    prod = (y[:, :f_pad] * y[:, f_pad:]).astype(mxu_dtype)   # [tile, F_pad]

    # 3) batched mat-vec finished by a block-sum matmul:
    #    transformed[i, r] = sum_c prod[i, r*A + c]
    transformed = jnp.dot(prod, bsum_ref[...],
                          preferred_element_type=jnp.float32)  # [tile, A]

    # 4) scatter-add as a transposed one-hot matmul: the MXU N dim and the
    #    accumulator stores are lane-dense over this 128-aligned atom block.
    col = lax.broadcasted_iota(jnp.int32, (1, atom_block), 1) + nb * atom_block
    onehot = (src_ref[...] == col).astype(mxu_dtype)           # [tile, atom_block]
    # TODO(synk): verify in the bundle dump whether contracting dim 0 of
    # `transformed` emits a per-step vxpose; if the XLU slot is not slack,
    # pre-transpose via a small [A, tile] scratch.
    contrib = lax.dot_general(
        transformed.astype(mxu_dtype), onehot,
        (((0,), (0,)), ((), ())),
        preferred_element_type=jnp.float32)                    # [A, atom_block]
    out_ref[...] += contrib


def bond_angle_network(atom_features, bond_angle_features,
                       bond_angle_pair_indices, W, bias, *,
                       tile_ba=2048, num_partials=1, atom_block=2048,
                       mxu_dtype=jnp.bfloat16):
    """Pallas TPU forward pass of BondAngleNetwork.

    num_partials: 1 on single-TensorCore chips (v5e/v6e); 2 on v7x (2 TCs).
    mxu_dtype: bfloat16 quantizes the streamed rows / constants (f32 accumulate)
               — exact 0/1 matrices are unaffected; use float32 for exactness.
    """
    n_atoms, A = atom_features.shape
    n_ba, D = bond_angle_features.shape
    F = A * A
    F_pad = _round_up(F, 128)                    # lane-dense A*A width
    itm = jnp.dtype(mxu_dtype).itemsize
    sub = max(8, 32 // itm)                      # sublane packing per dtype

    # Atom (output-lane) axis padded to 128 and split into column blocks.
    atom_block = max(128, _round_up(min(atom_block, _round_up(n_atoms, 128)), 128))
    n_pad = _round_up(_round_up(n_atoms, 128), atom_block)
    NB = n_pad // atom_block

    P = max(1, int(num_partials))                # megacore split (v7x)
    per_partial = _cdiv(n_ba, P)
    tile = _round_up(min(tile_ba, _round_up(per_partial, sub)), sub)
    T = _cdiv(per_partial, tile)
    n_ba_pad = P * T * tile
    pad_ba = n_ba_pad - n_ba

    src = bond_angle_pair_indices[:, 0].astype(jnp.int32)
    nbr = bond_angle_pair_indices[:, 1].astype(jnp.int32)

    # Data-dependent row gather done by XLA's native gather; guard against
    # jnp.take's clipping semantics so invalid/padded indices contribute zero.
    valid = (nbr >= 0) & (nbr < n_atoms)
    nbrs = jnp.take(atom_features.astype(jnp.float32),
                    jnp.clip(nbr, 0, n_atoms - 1), axis=0)          # [n_ba, A]
    nbrs = jnp.where(valid[:, None], nbrs, 0.0)

    # Packed per-row stream: X = [ba | nbr | 1] — one DMA stream / buffer pair.
    K_in = D + A + 1
    x = jnp.concatenate([bond_angle_features.astype(jnp.float32), nbrs,
                         jnp.ones((n_ba, 1), jnp.float32)], axis=1)
    x_p = jnp.pad(x, ((0, pad_ba), (0, 0))).astype(mxu_dtype)
    src_p = jnp.pad(src, (0, pad_ba), constant_values=-1).reshape(n_ba_pad, 1)

    # Merged constant matrix (built once, DMA'd once, resident):
    #   [[ W    | 0   ]        rows 0..D-1
    #    [ 0    | rep ]        rows D..D+A-1
    #    [ bias | 0   ]]       row  D+A  (picked up by the ones column)
    j = jnp.arange(F, dtype=jnp.int32)
    rep = (jnp.arange(A, dtype=jnp.int32)[:, None] == (j % A)[None, :]
           ).astype(jnp.float32)
    m = jnp.zeros((K_in, 2 * F_pad), jnp.float32)
    m = m.at[:D, :F].set(W.astype(jnp.float32).reshape(D, F))
    m = m.at[D:D + A, F_pad:F_pad + F].set(rep)
    m = m.at[D + A, :F].set(bias.astype(jnp.float32).reshape(F))
    m = m.astype(mxu_dtype)

    bsum = jnp.pad(
        ((j // A)[:, None] == jnp.arange(A, dtype=jnp.int32)[None, :])
        .astype(jnp.float32), ((0, F_pad - F), (0, 0))).astype(mxu_dtype)

    # VMEM budget computed from actual block sizes (not hard-coded to the chip).
    lane = 128
    x_blk = tile * _round_up(K_in, lane) * itm
    src_blk = tile * lane * 4
    m_bytes = _round_up(K_in, sub) * (2 * F_pad) * itm
    bsum_bytes = F_pad * lane * itm
    out_blk = _round_up(A, 8) * atom_block * 4
    interm = (tile * (2 * F_pad) * 4            # y
              + tile * F_pad * (4 + itm)        # prod (f32 + cast)
              + tile * lane * 4                 # transformed (A lanes, padded)
              + tile * atom_block * itm         # one-hot
              + _round_up(A, 8) * atom_block * 4)
    est = 2 * (x_blk + src_blk + m_bytes + bsum_bytes + out_blk) + interm
    vmem_limit = int(min(max(est + (4 << 20), 16 << 20), 56 << 20))

    cost = pl.CostEstimate(
        flops=int(NB * 2 * n_ba_pad * (K_in * 2 * F_pad + F_pad * A)
                  + 2 * n_ba_pad * A * n_pad),
        transcendentals=0,
        bytes_accessed=int(NB * n_ba_pad * (K_in * itm + 4)
                           + K_in * 2 * F_pad * itm + F_pad * A * itm
                           + P * A * n_pad * 4),
    )

    def row_map(p, nb, k):
        return (p * T + k, 0)

    def const_map(p, nb, k):
        return (0, 0)

    out_p = pl.pallas_call(
        functools.partial(_bond_angle_kernel, mxu_dtype=mxu_dtype,
                          atom_block=atom_block, f_pad=F_pad),
        out_shape=jax.ShapeDtypeStruct((P, A, n_pad), jnp.float32),
        grid_spec=pltpu.PrefetchScalarGridSpec(
            num_scalar_prefetch=0,
            grid=(P, NB, T),
            in_specs=[
                pl.BlockSpec((tile, K_in), row_map),         # packed [ba|nbr|1]
                pl.BlockSpec((tile, 1), row_map),            # scatter indices
                pl.BlockSpec((K_in, 2 * F_pad), const_map),  # merged W/bias/rep
                pl.BlockSpec((F_pad, A), const_map),         # block-sum matrix
            ],
            out_specs=pl.BlockSpec((None, A, atom_block),
                                   lambda p, nb, k: (p, nb, 0)),
        ),
        compiler_params=pltpu.CompilerParams(
            dimension_semantics=("parallel", "parallel", "arbitrary"),
            vmem_limit_bytes=vmem_limit,
        ),
        cost_estimate=cost,
    )(x_p, src_p, m, bsum)

    # Sum the per-core partials, drop atom padding, transpose back to [N, A].
    out = out_p.sum(axis=0) if P > 1 else out_p[0]
    out = out[:, :n_atoms].T
    return out.astype(atom_features.dtype)


def reference(atom_features, bond_angle_features, pair_indices, W, bias, atom_dim):
    x = bond_angle_features @ W + bias
    x = x.reshape(-1, atom_dim, atom_dim)
    nbrs = atom_features[pair_indices[:, 1]]
    t = jnp.einsum('brc,bc->br', x, nbrs)
    return jnp.zeros_like(atom_features).at[pair_indices[:, 0]].add(t)


if __name__ == "__main__":
    atom_dim = 8
    bond_angle_dim = 16
    n_atoms = 16
    n_ba = 32

    key = jax.random.PRNGKey(0)
    k1, k2, k3, k4 = jax.random.split(key, 4)

    atom_features = jax.random.normal(k1, (n_atoms, atom_dim), jnp.float32)
    bond_angle_features = jax.random.normal(k2, (n_ba, bond_angle_dim), jnp.float32)
    pair_indices = jax.random.randint(k3, (n_ba, 2), 0, n_atoms, jnp.int32)

    # Deterministic xavier_uniform-style W (fan_in = atom_dim^2, fan_out = bond_angle_dim).
    fan_in = atom_dim * atom_dim
    fan_out = bond_angle_dim
    bound = (6.0 / (fan_in + fan_out)) ** 0.5
    W = jax.random.uniform(k4, (bond_angle_dim, atom_dim * atom_dim),
                           jnp.float32, -bound, bound)
    bias = jnp.zeros((atom_dim * atom_dim,), jnp.float32)

    ref = reference(atom_features, bond_angle_features, pair_indices, W, bias, atom_dim)

    # f32 MXU path, single partial (v5e/v6e default): exact match vs. reference.
    out = bond_angle_network(atom_features, bond_angle_features, pair_indices,
                             W, bias, num_partials=1, mxu_dtype=jnp.float32)
    out = jax.block_until_ready(out)
    assert out.shape == (n_atoms, atom_dim)
    assert jnp.allclose(out, ref, atol=1e-4, rtol=1e-4), "f32 kernel mismatch vs reference"

    # bf16 fast path with 2 partials (exercises the v7x 2-TC split): loose tolerance.
    out_bf16 = bond_angle_network(atom_features, bond_angle_features, pair_indices,
                                  W, bias, num_partials=2, mxu_dtype=jnp.bfloat16)
    out_bf16 = jax.block_until_ready(out_bf16)
    assert jnp.allclose(out_bf16, ref, atol=2.5e-1, rtol=1e-1), "bf16 kernel deviates too much"

    print("KERNEL_OK")
</pallas_src>

<mosaic_0001>
module attributes {stable_mosaic.version = 11 : i64} {
  func.func @_bond_angle_kernel(%arg0: i32, %arg1: i32, %arg2: i32, %arg3: memref<32x25xf32, #tpu.memory_space<vmem>>, %arg4: memref<32x1xi32, #tpu.memory_space<vmem>>, %arg5: memref<25x256xf32, #tpu.memory_space<vmem>>, %arg6: memref<128x8xf32, #tpu.memory_space<vmem>>, %arg7: memref<1x8x128xf32, #tpu.memory_space<vmem>>) attributes {dimension_semantics = [#tpu.dimension_semantics<parallel>, #tpu.dimension_semantics<parallel>, #tpu.dimension_semantics<arbitrary>], iteration_bounds = array<i64: 1, 1, 1>, scalar_prefetch = 0 : i64, scratch_operands = 0 : i64, tpu.core_type = #tpu.core_type<tc>, window_params = [{transform_indices = @transform_0, window_bounds = array<i64: 32, 25>}, {transform_indices = @transform_1, window_bounds = array<i64: 32, 1>}, {pipeline_mode = #tpu.pipeline_mode<synchronous>, transform_indices = @transform_2, window_bounds = array<i64: 25, 256>}, {pipeline_mode = #tpu.pipeline_mode<synchronous>, transform_indices = @transform_3, window_bounds = array<i64: 128, 8>}, {transform_indices = @transform_4, window_bounds = array<i64: 1, 8, 128>}]} {
    %c0_i32 = arith.constant 0 : i32
    %0 = arith.cmpi eq, %arg2, %c0_i32 : i32
    %1 = arith.extui %0 : i1 to i32
    %c0_i32_0 = arith.constant 0 : i32
    %2 = arith.cmpi ne, %1, %c0_i32_0 : i32
    scf.if %2 {
      %cst_16 = arith.constant 0.000000e+00 : f32
      %28 = vector.broadcast %cst_16 : f32 to vector<8x128xf32>
      %c0_17 = arith.constant 0 : index
      %c0_18 = arith.constant 0 : index
      %c0_19 = arith.constant 0 : index
      %29 = vector.load %arg7[%c0_17, %c0_18, %c0_19] : memref<1x8x128xf32, #tpu.memory_space<vmem>>, vector<1x8x128xf32>
      %30 = vector.shape_cast %29 : vector<1x8x128xf32> to vector<8x128xf32>
      %31 = vector.shape_cast %28 : vector<8x128xf32> to vector<1x8x128xf32>
      tpu.vector_store %arg7[%c0_17, %c0_18, %c0_19], %31 {strides = array<i32>} : memref<1x8x128xf32, #tpu.memory_space<vmem>>, vector<1x8x128xf32>,
    } else {
    }
    %c0 = arith.constant 0 : index
    %c0_1 = arith.constant 0 : index
    %3 = vector.load %arg3[%c0, %c0_1] : memref<32x25xf32, #tpu.memory_space<vmem>>, vector<32x25xf32>
    %c0_2 = arith.constant 0 : index
    %c0_3 = arith.constant 0 : index
    %4 = vector.load %arg5[%c0_2, %c0_3] : memref<25x256xf32, #tpu.memory_space<vmem>>, vector<25x256xf32>
    %cst = arith.constant dense<0.000000e+00> : vector<32x256xf32>
    %5 = tpu.matmul %3, %4, %cst {dimension_numbers = #tpu.dot_dimension_numbers<[1], [0], [0], [1], [0, 0, 1, 1], [], []>} : vector<32x25xf32>, vector<25x256xf32>, vector<32x256xf32> -> vector<32x256xf32>
    %6 = vector.extract_strided_slice %5 {offsets = [0, 0], sizes = [32, 128], strides = [1, 1]} : vector<32x256xf32> to vector<32x128xf32>
    %7 = vector.extract_strided_slice %5 {offsets = [0, 128], sizes = [32, 128], strides = [1, 1]} : vector<32x256xf32> to vector<32x128xf32>
    %8 = arith.mulf %6, %7 : vector<32x128xf32>
    %c0_4 = arith.constant 0 : index
    %c0_5 = arith.constant 0 : index
    %9 = vector.load %arg6[%c0_4, %c0_5] : memref<128x8xf32, #tpu.memory_space<vmem>>, vector<128x8xf32>
    %cst_6 = arith.constant dense<0.000000e+00> : vector<32x8xf32>
    %10 = tpu.matmul %8, %9, %cst_6 {dimension_numbers = #tpu.dot_dimension_numbers<[1], [0], [0], [1], [0, 0, 1, 1], [], []>} : vector<32x128xf32>, vector<128x8xf32>, vector<32x8xf32> -> vector<32x8xf32>
    %11 = tpu.iota {dimensions = array<i32: 1>} : vector<1x128xi32>
    %c128_i32 = arith.constant 128 : i32
    %12 = arith.muli %arg1, %c128_i32 : i32
    %13 = vector.broadcast %12 : i32 to vector<1x128xi32>
    %14 = arith.addi %11, %13 : vector<1x128xi32>
    %c0_7 = arith.constant 0 : index
    %c0_8 = arith.constant 0 : index
    %15 = vector.load %arg4[%c0_7, %c0_8] : memref<32x1xi32, #tpu.memory_space<vmem>>, vector<32x1xi32>
    %16 = vector.broadcast %15 : vector<32x1xi32> to vector<32x128xi32>
    %17 = vector.broadcast %14 : vector<1x128xi32> to vector<32x128xi32>
    %18 = arith.cmpi eq, %16, %17 : vector<32x128xi32>
    %19 = arith.extui %18 : vector<32x128xi1> to vector<32x128xi32>
    %20 = arith.sitofp %19 : vector<32x128xi32> to vector<32x128xf32>
    %cst_9 = arith.constant dense<0.000000e+00> : vector<8x128xf32>
    %21 = tpu.matmul %10, %20, %cst_9 {dimension_numbers = #tpu.dot_dimension_numbers<[0], [0], [1], [1], [0, 1, 1, 1], [], []>} : vector<32x8xf32>, vector<32x128xf32>, vector<8x128xf32> -> vector<8x128xf32>
    %c0_10 = arith.constant 0 : index
    %c0_11 = arith.constant 0 : index
    %c0_12 = arith.constant 0 : index
    %22 = vector.load %arg7[%c0_10, %c0_11, %c0_12] : memref<1x8x128xf32, #tpu.memory_space<vmem>>, vector<1x8x128xf32>
    %23 = vector.shape_cast %22 : vector<1x8x128xf32> to vector<8x128xf32>
    %24 = arith.addf %23, %21 : vector<8x128xf32>
    %c0_13 = arith.constant 0 : index
    %c0_14 = arith.constant 0 : index
    %c0_15 = arith.constant 0 : index
    %25 = vector.load %arg7[%c0_13, %c0_14, %c0_15] : memref<1x8x128xf32, #tpu.memory_space<vmem>>, vector<1x8x128xf32>
    %26 = vector.shape_cast %25 : vector<1x8x128xf32> to vector<8x128xf32>
    %27 = vector.shape_cast %24 : vector<8x128xf32> to vector<1x8x128xf32>
    tpu.vector_store %arg7[%c0_13, %c0_14, %c0_15], %27 {strides = array<i32>} : memref<1x8x128xf32, #tpu.memory_space<vmem>>, vector<1x8x128xf32>,
    return
  }
  func.func @transform_0(%arg0: i32, %arg1: i32, %arg2: i32) -> (i32, i32) {
    %c1_i32 = arith.constant 1 : i32
    %0 = arith.muli %arg0, %c1_i32 : i32
    %1 = arith.addi %0, %arg2 : i32
    %c0_i32 = arith.constant 0 : i32
    %c0_i32_0 = arith.constant 0 : i32
    return %1, %c0_i32 : i32, i32
  }
  func.func @transform_1(%arg0: i32, %arg1: i32, %arg2: i32) -> (i32, i32) {
    %c1_i32 = arith.constant 1 : i32
    %0 = arith.muli %arg0, %c1_i32 : i32
    %1 = arith.addi %0, %arg2 : i32
    %c0_i32 = arith.constant 0 : i32
    %c0_i32_0 = arith.constant 0 : i32
    return %1, %c0_i32 : i32, i32
  }
  func.func @transform_2(%arg0: i32, %arg1: i32, %arg2: i32) -> (i32, i32) {
    %c0_i32 = arith.constant 0 : i32
    %c0_i32_0 = arith.constant 0 : i32
    %c0_i32_1 = arith.constant 0 : i32
    return %c0_i32, %c0_i32_0 : i32, i32
  }
  func.func @transform_3(%arg0: i32, %arg1: i32, %arg2: i32) -> (i32, i32) {
    %c0_i32 = arith.constant 0 : i32
    %c0_i32_0 = arith.constant 0 : i32
    %c0_i32_1 = arith.constant 0 : i32
    return %c0_i32, %c0_i32_0 : i32, i32
  }
  func.func @transform_4(%arg0: i32, %arg1: i32, %arg2: i32) -> (i32, i32, i32) {
    %c0_i32 = arith.constant 0 : i32
    %c0_i32_0 = arith.constant 0 : i32
    return %arg0, %arg1, %c0_i32 : i32, i32, i32
  }
}

</mosaic_0001>

<llo_original>
// kernel: tpu_custom_call.1
$region0: #{tpu_custom_call.1}
  #allocation0 [shape = 'u32[]', space=smem, size = 0x4, offset = 0x4, fixed_abs, tag = 'smem constant byte address 0x4 - core index']
  #allocation1 [shape = 'u32[144,128]{1,0:T(1,128)}', space=vmem, size = 0x12000, scoped, tag = 'internal scratch']
  %s0 = inlined_call_operand.vmem [shape: f32[32,25], index: 0, kind: input, shape index: {}]
  %s1 = inlined_call_operand.vmem [shape: s32[32,1], index: 1, kind: input, shape index: {}]
  %s2 = inlined_call_operand.vmem [shape: f32[25,256], index: 2, kind: input, shape index: {}]
  %s3 = inlined_call_operand.vmem [shape: f32[128,8], index: 3, kind: input, shape index: {}]
  %s4 = inlined_call_operand.hbm [shape: f32[1,8,128], index: 4, kind: output, shape index: {}]
  %s5 = sld [smem:[#allocation0]]
  $region30: #{tpu_custom_call.1} parent=0
    _
  %s7 = ssub.s32 1, %s5
  %s8 = scalar_select 0, %s7, %s5
  $region1: #{tpu_custom_call.1} parent=0
    #allocation2 [shape = 'u8[4096]{0}', space=vmem, size = 0x1000, scoped, tag = 'output window, operand 0, single buffered']
    #allocation3 [shape = 's32[1]{0}', space=sflag, size = 0x4, scoped, tag = 'scoped memory for tpu_custom_call.1']
    %9 = vsyncpa [#allocation3], 0
    // Predicated region
    $region2: #{tpu_custom_call.1} parent=1 // pred_check
      _
    $region3: #{tpu_custom_call.1} parent=1 // pred_check_branch
      %11 = sbr.rel (0) target = $region5
    $region4: #{tpu_custom_call.1} parent=1 // pred_region
      %s12 = sadd.s32 0, 0
      %s13 = smul.u32 4, %s12
      %p14 = scmp.lt.s32.totalorder %s13, 3
      %s15 = scalar_select %p14, %s13, 3
      %s16 = smul.addr %s15, 8
      %s17 = scalar_lea.vmem %s0, %s16
      %s18 = sadd.s32 0, 0
      %s19 = smul.u32 4, %s18
    $region5: #{tpu_custom_call.1} parent=1 // pred_fallthru
      _
    // Predicated region
    $region6: #{tpu_custom_call.1} parent=1 // pred_check
      _
    $region7: #{tpu_custom_call.1} parent=1 // pred_check_branch
      %21 = sbr.rel (0) target = $region9
    $region8: #{tpu_custom_call.1} parent=1 // pred_region
      %s22 = sadd.s32 0, 0
      %s23 = smul.u32 4, %s22
      %p24 = scmp.lt.s32.totalorder %s23, 3
      %s25 = scalar_select %p24, %s23, 3
      %s26 = smul.addr %s25, 8
      %s27 = scalar_lea.vmem %s1, %s26
      %s28 = sadd.s32 0, 0
      %s29 = smul.u32 4, %s28
    $region9: #{tpu_custom_call.1} parent=1 // pred_fallthru
      _
    // Predicated region
    $region10: #{tpu_custom_call.1} parent=1 // pred_check
      _
    $region11: #{tpu_custom_call.1} parent=1 // pred_check_branch
      %31 = sbr.rel (0) target = $region13
    $region12: #{tpu_custom_call.1} parent=1 // pred_region
      _
    $region13: #{tpu_custom_call.1} parent=1 // pred_fallthru
      _
    // Predicated region
    $region14: #{tpu_custom_call.1} parent=1 // pred_check
      _
    $region15: #{tpu_custom_call.1} parent=1 // pred_check_branch
      %33 = sbr.rel (0) target = $region17
    $region16: #{tpu_custom_call.1} parent=1 // pred_region
      _
    $region17: #{tpu_custom_call.1} parent=1 // pred_fallthru
      _
    %s34 = sadd.s32 0, 0
    %s35 = smul.u32 4, %s34
    %p36 = scmp.lt.s32.totalorder %s35, 3
    %s37 = scalar_select %p36, %s35, 3
    %s38 = smul.addr %s37, 8
    %s39 = scalar_lea.vmem %s0, %s38
    %s40 = sadd.s32 0, 0
    %s41 = smul.u32 4, %s40
    %p42 = scmp.lt.s32.totalorder %s41, 3
    %s43 = scalar_select %p42, %s41, 3
    %s44 = smul.addr %s43, 8
    %s45 = scalar_lea.vmem %s1, %s44
    %s46 = sadd.s32 0, 0
    %s47 = smul.u32 4, %s46
    %p48 = scmp.lt.s32.totalorder %s47, 3
    %s49 = scalar_select %p48, %s47, 3
    %s50 = smul.addr %s49, 8
    %s51 = scalar_lea.vmem %s0, %s50
    %s52 = sadd.s32 0, 0
    %s53 = smul.u32 4, %s52
    %s54 = sadd.s32 0, 0
    %s55 = smul.u32 4, %s54
    %p56 = scmp.lt.s32.totalorder %s55, 3
    %s57 = scalar_select %p56, %s55, 3
    %s58 = smul.addr %s57, 8
    %s59 = scalar_lea.vmem %s1, %s58
    %s60 = sadd.s32 0, 0
    %s61 = smul.u32 4, %s60
    %p62 = scmp.eq.s32.totalorder 0, 0
    // Predicated region
    $region18: #{tpu_custom_call.1} parent=1 // pred_check
      %p63 = pneg %p62
    $region19: #{tpu_custom_call.1} parent=1 // pred_check_branch
      %65 = sbr.rel (%p63) target = $region21
    $region20: #{tpu_custom_call.1} parent=1 // pred_region
      %66 = vst [vmem:[#allocation2] sm:$0xff] 0.0
    $region21: #{tpu_custom_call.1} parent=1 // pred_fallthru
      _
    %v67 = vld [vmem:[%s51] sm:$0xff]
    %v68 = vld [vmem:[%s51 + $0x8] sm:$0xff]
    %v69 = vld [vmem:[%s51 + $0x10] sm:$0xff]
    %v70 = vld [vmem:[%s51 + $0x18] sm:$0xff]
    %v71 = vld [vmem:[%s2] sm:$0xff]
    %v72 = vld [vmem:[%s2 + $0x8] sm:$0xff]
    %v73 = vld [vmem:[%s2 + $0x10] sm:$0xff]
    %v74 = vld [vmem:[%s2 + $0x18] sm:$0xff]
    %v75 = vld [vmem:[%s2 + $0x20] sm:$0xff]
    %v76 = vld [vmem:[%s2 + $0x28] sm:$0xff]
    %v77 = vld [vmem:[%s2 + $0x30] sm:$0x1]
    %v78 = vld [vmem:[%s2 + $0x38] sm:$0x1]
    %vm79 = vcmask 203776
    %v81 = vsel %vm79, %v67, 0
    %v84 = vsel %vm79, %v68, 0
    %v87 = vsel %vm79, %v69, 0
    %v90 = vsel %vm79, %v70, 0
    %vm92 = vcmask 1040384
    %v94 = vsel %vm92, %v77, 0
    %v97 = vsel %vm92, %v78, 0
    %99 = vmatprep.subr.mxu0 %v72
    %100 = vmatpush1.msra.mxu0 %v71
    %101 = vmatprep.subr.mxu0 %v74
    %102 = vmatpush1.msra.mxu0 %v73
    %103 = vmatprep.subr.mxu0 %v76
    %104 = vmatpush1.msra.mxu0 %v75
    %105 = vmatprep.subr.mxu0 %v97
    %106 = vmatpush1.msra.mxu0 %v94
    %107 = vmatprep.subr.mxu0 0.0
    %108 = vmatpush1.msra.mxu0 0.0
    %109 = vmatprep.subr.mxu0 0.0
    %110 = vmatpush1.msra.mxu0 0.0
    %111 = vmatprep.subr.mxu0 0.0
    %112 = vmatpush1.msra.mxu0 0.0
    %113 = vmatprep.subr.mxu0 0.0
    %114 = vmatpush1.msra.mxu0 0.0
    %115 = vmatprep.subr.mxu0 0.0
    %116 = vmatpush1.msra.mxu0 0.0
    %117 = vmatprep.subr.mxu0 0.0
    %118 = vmatpush1.msra.mxu0 0.0
    %119 = vmatprep.subr.mxu0 0.0
    %120 = vmatpush1.msra.mxu0 0.0
    %121 = vmatprep.subr.mxu0 0.0
    %122 = vmatpush1.msra.mxu0 0.0
    %123 = vmatprep.subr.mxu0 0.0
    %124 = vmatpush1.msra.mxu0 0.0
    %125 = vmatprep.subr.mxu0 0.0
    %126 = vmatpush1.msra.mxu0 0.0
    %127 = vmatprep.subr.mxu0 0.0
    %128 = vmatpush1.msra.mxu0 0.0
    %129 = vmatprep.subr.mxu0 0.0
    %130 = vmatpush1.msra.mxu0 0.0
    %131 = vmatprep.subr.mxu0 0.0
    %132 = vmatpush1.msra.mxu0 0.0
    %133 = vmatprep.subr.mxu0 0.0
    %134 = vmatpush1.msra.mxu0 0.0
    %135 = vmatprep.subr.mxu0 0.0
    %136 = vmatpush1.msra.mxu0 0.0
    %137 = vmatprep.subr.mxu0 0.0
    %138 = vmatpush1.msra.mxu0 0.0
    %139 = vmatprep.subr.mxu0 0.0
    %140 = vmatpush1.msra.mxu0 0.0
    %141 = vmatprep.subr.mxu0 0.0
    %142 = vmatpush1.msra.mxu0 0.0
    %143 = vmatprep.subr.mxu0 0.0
    %144 = vmatpush1.msra.mxu0 0.0
    %145 = vmatprep.subr.mxu0 0.0
    %146 = vmatpush1.msra.mxu0 0.0
    %147 = vmatprep.subr.mxu0 0.0
    %148 = vmatpush1.msra.mxu0 0.0
    %149 = vmatprep.subr.mxu0 0.0
    %150 = vmatpush1.msra.mxu0 0.0
    %151 = vmatprep.subr.mxu0 0.0
    %152 = vmatpush1.msra.mxu0 0.0
    %153 = vmatprep.subr.mxu0 0.0
    %154 = vmatpush1.msra.mxu0 0.0
    %155 = vmatprep.subr.mxu0 0.0
    %156 = vmatpush1.msra.mxu0 0.0
    %157 = vmatprep.subr.mxu0 0.0
    %158 = vmatpush1.msra.mxu0 0.0
    %159 = vmatprep.subr.mxu0 0.0
    %160 = vmatpush1.msra.mxu0 0.0
    %161 = vmatprep.subr.mxu0 0.0
    %162 = vmatpush1.msra.mxu0 0.0
    %163 = vmatprep.mubr.f32.mxu0 0.0
    %164 = vmatmul.mubr.f32.gmra.mrb[0].mxu0 %v81
    %v165 = vpop.f32.mrb[0].mxu0
    %v166 = vadd.f32 0.0, %v165
    %v167 = vpop.f32.mrb[0].mxu0
    %v168 = vadd.f32 0.0, %v167
    %169 = vmatprep.mubr.f32.mxu0 0.0
    %170 = vmatmul.mubr.f32.gmra.mrb[0].mxu0 %v84
    %v171 = vpop.f32.mrb[0].mxu0
    %v172 = vadd.f32 0.0, %v171
    %v173 = vpop.f32.mrb[0].mxu0
    %v174 = vadd.f32 0.0, %v173
    %175 = vmatprep.mubr.f32.mxu0 0.0
    %176 = vmatmul.mubr.f32.gmra.mrb[0].mxu0 %v87
    %v177 = vpop.f32.mrb[0].mxu0
    %v178 = vadd.f32 0.0, %v177
    %v179 = vpop.f32.mrb[0].mxu0
    %v180 = vadd.f32 0.0, %v179
    %181 = vmatprep.mubr.f32.mxu0 0.0
    %182 = vmatmul.mubr.f32.gmra.mrb[0].mxu0 %v90
    %v183 = vpop.f32.mrb[0].mxu0
    %v184 = vadd.f32 0.0, %v183
    %v185 = vpop.f32.mrb[0].mxu0
    %v186 = vadd.f32 0.0, %v185
    %187 = vdwg.mxu0
    %v188 = vmul.f32 %v166, %v168
    %v189 = vmul.f32 %v172, %v174
    %v190 = vmul.f32 %v178, %v180
    %v191 = vmul.f32 %v184, %v186
    %v192 = vld [vmem:[%s3] sm:$0xff]
    %v193 = vld [vmem:[%s3 + $0x8] sm:$0xff]
    %v194 = vld [vmem:[%s3 + $0x10] sm:$0xff]
    %v195 = vld [vmem:[%s3 + $0x18] sm:$0xff]
    %v196 = vld [vmem:[%s3 + $0x20] sm:$0xff]
    %v197 = vld [vmem:[%s3 + $0x28] sm:$0xff]
    %v198 = vld [vmem:[%s3 + $0x30] sm:$0xff]
    %v199 = vld [vmem:[%s3 + $0x38] sm:$0xff]
    %v200 = vld [vmem:[%s3 + $0x40] sm:$0xff]
    %v201 = vld [vmem:[%s3 + $0x48] sm:$0xff]
    %v202 = vld [vmem:[%s3 + $0x50] sm:$0xff]
    %v203 = vld [vmem:[%s3 + $0x58] sm:$0xff]
    %v204 = vld [vmem:[%s3 + $0x60] sm:$0xff]
    %v205 = vld [vmem:[%s3 + $0x68] sm:$0xff]
    %v206 = vld [vmem:[%s3 + $0x70] sm:$0xff]
    %v207 = vld [vmem:[%s3 + $0x78] sm:$0xff]
    %208 = vmatprep.subr.mxu0 0.0
    %209 = vmatpush1.msra.mxu0 %v192
    %210 = vmatprep.subr.mxu0 0.0
    %211 = vmatpush1.msra.mxu0 %v193
    %212 = vmatprep.subr.mxu0 0.0
    %213 = vmatpush1.msra.mxu0 %v194
    %214 = vmatprep.subr.mxu0 0.0
    %215 = vmatpush1.msra.mxu0 %v195
    %216 = vmatprep.subr.mxu0 0.0
    %217 = vmatpush1.msra.mxu0 %v196
    %218 = vmatprep.subr.mxu0 0.0
    %219 = vmatpush1.msra.mxu0 %v197
    %220 = vmatprep.subr.mxu0 0.0
    %221 = vmatpush1.msra.mxu0 %v198
    %222 = vmatprep.subr.mxu0 0.0
    %223 = vmatpush1.msra.mxu0 %v199
    %224 = vmatprep.subr.mxu0 0.0
    %225 = vmatpush1.msra.mxu0 %v200
    %226 = vmatprep.subr.mxu0 0.0
    %227 = vmatpush1.msra.mxu0 %v201
    %228 = vmatprep.subr.mxu0 0.0
    %229 = vmatpush1.msra.mxu0 %v202
    %230 = vmatprep.subr.mxu0 0.0
    %231 = vmatpush1.msra.mxu0 %v203
    %232 = vmatprep.subr.mxu0 0.0
    %233 = vmatpush1.msra.mxu0 %v204
    %234 = vmatprep.subr.mxu0 0.0
    %235 = vmatpush1.msra.mxu0 %v205
    %236 = vmatprep.subr.mxu0 0.0
    %237 = vmatpush1.msra.mxu0 %v206
    %238 = vmatprep.subr.mxu0 0.0
    %239 = vmatpush1.msra.mxu0 %v207
    %240 = vmatprep.subr.mxu0 0.0
    %241 = vmatpush1.msra.mxu0 0.0
    %242 = vmatprep.subr.mxu0 0.0
    %243 = vmatpush1.msra.mxu0 0.0
    %244 = vmatprep.subr.mxu0 0.0
    %245 = vmatpush1.msra.mxu0 0.0
    %246 = vmatprep.subr.mxu0 0.0
    %247 = vmatpush1.msra.mxu0 0.0
    %248 = vmatprep.subr.mxu0 0.0
    %249 = vmatpush1.msra.mxu0 0.0
    %250 = vmatprep.subr.mxu0 0.0
    %251 = vmatpush1.msra.mxu0 0.0
    %252 = vmatprep.subr.mxu0 0.0
    %253 = vmatpush1.msra.mxu0 0.0
    %254 = vmatprep.subr.mxu0 0.0
    %255 = vmatpush1.msra.mxu0 0.0
    %256 = vmatprep.subr.mxu0 0.0
    %257 = vmatpush1.msra.mxu0 0.0
    %258 = vmatprep.subr.mxu0 0.0
    %259 = vmatpush1.msra.mxu0 0.0
    %260 = vmatprep.subr.mxu0 0.0
    %261 = vmatpush1.msra.mxu0 0.0
    %262 = vmatprep.subr.mxu0 0.0
    %263 = vmatpush1.msra.mxu0 0.0
    %264 = vmatprep.subr.mxu0 0.0
    %265 = vmatpush1.msra.mxu0 0.0
    %266 = vmatprep.subr.mxu0 0.0
    %267 = vmatpush1.msra.mxu0 0.0
    %268 = vmatprep.subr.mxu0 0.0
    %269 = vmatpush1.msra.mxu0 0.0
    %270 = vmatprep.subr.mxu0 0.0
    %271 = vmatpush1.msra.mxu0 0.0
    %272 = vmatprep.mubr.f32.mxu0 0.0
    %273 = vmatmul.mubr.f32.gmra.mrb[0].mxu0 %v188
    %v274 = vpop.f32.mrb[0].mxu0
    %v275 = vadd.f32 0.0, %v274
    %v276 = vpop.f32.mrb[0].mxu0
    %277 = vmatprep.mubr.f32.mxu0 0.0
    %278 = vmatmul.mubr.f32.gmra.mrb[0].mxu0 %v189
    %v279 = vpop.f32.mrb[0].mxu0
    %v280 = vadd.f32 0.0, %v279
    %v281 = vpop.f32.mrb[0].mxu0
    %282 = vmatprep.mubr.f32.mxu0 0.0
    %283 = vmatmul.mubr.f32.gmra.mrb[0].mxu0 %v190
    %v284 = vpop.f32.mrb[0].mxu0
    %v285 = vadd.f32 0.0, %v284
    %v286 = vpop.f32.mrb[0].mxu0
    %287 = vmatprep.mubr.f32.mxu0 0.0
    %288 = vmatmul.mubr.f32.gmra.mrb[0].mxu0 %v191
    %v289 = vpop.f32.mrb[0].mxu0
    %v290 = vadd.f32 0.0, %v289
    %v291 = vpop.f32.mrb[0].mxu0
    %292 = vdwg.mxu0
    %v293 = vlaneseq
    %v294 = vand.u32 %v293, 127
    %s295 = smul.u32 0, 128
    %v296 = vstv %s295
    %v297 = vadd.s32 %v294, %v296
    %v298 = vld [vmem:[%s59] sm:$0xff]
    %v299 = vld [vmem:[%s59 + $0x8] sm:$0xff]
    %v300 = vld [vmem:[%s59 + $0x10] sm:$0xff]
    %v301 = vld [vmem:[%s59 + $0x18] sm:$0xff]
    %302 = vset.pattern.permute.xlu0 0
    %303 = vperm.xlu0 %302, %v298
    %v304 = vpop.permute.xlu0 %303
    %305 = vset.pattern.permute.xlu0 0
    %306 = vperm.xlu0 %305, %v299
    %v307 = vpop.permute.xlu0 %306
    %308 = vset.pattern.permute.xlu0 0
    %309 = vperm.xlu0 %308, %v300
    %v310 = vpop.permute.xlu0 %309
    %311 = vset.pattern.permute.xlu0 0
    %312 = vperm.xlu0 %311, %v301
    %v313 = vpop.permute.xlu0 %312
    %vm314 = vcmp.eq.s32.totalorder %v304, %v297
    %vm315 = vcmp.eq.s32.totalorder %v307, %v297
    %vm316 = vcmp.eq.s32.totalorder %v310, %v297
    %vm317 = vcmp.eq.s32.totalorder %v313, %v297
    %v318 = vsel %vm314, 1, 0
    %v319 = vsel %vm315, 1, 0
    %v320 = vsel %vm316, 1, 0
    %v321 = vsel %vm317, 1, 0
    %v322 = vcvt.s32.f32 %v318
    %v323 = vcvt.s32.f32 %v319
    %v324 = vcvt.s32.f32 %v320
    %v325 = vcvt.s32.f32 %v321
    %326 = vxpose.xlu0.b32.start [1/16] %v275, 128
    %327 = vxpose.xlu0.b32.cont [2/16] %v280, 128
    %328 = vxpose.xlu0.b32.cont [3/16] %v285, 128
    %329 = vxpose.xlu0.b32.cont [4/16] %v290, 128
    %330 = vxpose.xlu0.b32.cont [5/16] 0.0, 128
    %331 = vxpose.xlu0.b32.cont [6/16] 0.0, 128
    %332 = vxpose.xlu0.b32.cont [7/16] 0.0, 128
    %333 = vxpose.xlu0.b32.cont [8/16] 0.0, 128
    %334 = vxpose.xlu0.b32.cont [9/16] 0.0, 128
    %335 = vxpose.xlu0.b32.cont [10/16] 0.0, 128
    %336 = vxpose.xlu0.b32.cont [11/16] 0.0, 128
    %337 = vxpose.xlu0.b32.cont [12/16] 0.0, 128
    %338 = vxpose.xlu0.b32.cont [13/16] 0.0, 128
    %339 = vxpose.xlu0.b32.cont [14/16] 0.0, 128
    %340 = vxpose.xlu0.b32.cont [15/16] 0.0, 128
    %341 = vxpose.xlu0.b32.end [16/16] 0.0, 128
    %v342 = vpop.trf.xlu0
    %v343 = vpop.trf.xlu0
    %v344 = vpop.trf.xlu0
    %v345 = vpop.trf.xlu0
    %v346 = vpop.trf.xlu0
    %v347 = vpop.trf.xlu0
    %v348 = vpop.trf.xlu0
    %v349 = vpop.trf.xlu0
    %v350 = vpop.trf.xlu0
    %v351 = vpop.trf.xlu0
    %v352 = vpop.trf.xlu0
    %v353 = vpop.trf.xlu0
    %v354 = vpop.trf.xlu0
    %v355 = vpop.trf.xlu0
    %v356 = vpop.trf.xlu0
    %v357 = vpop.trf.xlu0
    %vm358 = vcmask 261120
    %v360 = vsel %vm358, %v342, 0
    %362 = vmatprep.subr.mxu0 0.0
    %363 = vmatpush1.msra.mxu0 %v322
    %364 = vmatprep.subr.mxu0 0.0
    %365 = vmatpush1.msra.mxu0 %v323
    %366 = vmatprep.subr.mxu0 0.0
    %367 = vmatpush1.msra.mxu0 %v324
    %368 = vmatprep.subr.mxu0 0.0
    %369 = vmatpush1.msra.mxu0 %v325
    %370 = vmatprep.subr.mxu0 0.0
    %371 = vmatpush1.msra.mxu0 0.0
    %372 = vmatprep.subr.mxu0 0.0
    %373 = vmatpush1.msra.mxu0 0.0
    %374 = vmatprep.subr.mxu0 0.0
    %375 = vmatpush1.msra.mxu0 0.0
    %376 = vmatprep.subr.mxu0 0.0
    %377 = vmatpush1.msra.mxu0 0.0
    %378 = vmatprep.subr.mxu0 0.0
    %379 = vmatpush1.msra.mxu0 0.0
    %380 = vmatprep.subr.mxu0 0.0
    %381 = vmatpush1.msra.mxu0 0.0
    %382 = vmatprep.subr.mxu0 0.0
    %383 = vmatpush1.msra.mxu0 0.0
    %384 = vmatprep.subr.mxu0 0.0
    %385 = vmatpush1.msra.mxu0 0.0
    %386 = vmatprep.subr.mxu0 0.0
    %387 = vmatpush1.msra.mxu0 0.0
    %388 = vmatprep.subr.mxu0 0.0
    %389 = vmatpush1.msra.mxu0 0.0
    %390 = vmatprep.subr.mxu0 0.0
    %391 = vmatpush1.msra.mxu0 0.0
    %392 = vmatprep.subr.mxu0 0.0
    %393 = vmatpush1.msra.mxu0 0.0
    %394 = vmatprep.subr.mxu0 0.0
    %395 = vmatpush1.msra.mxu0 0.0
    %396 = vmatprep.subr.mxu0 0.0
    %397 = vmatpush1.msra.mxu0 0.0
    %398 = vmatprep.subr.mxu0 0.0
    %399 = vmatpush1.msra.mxu0 0.0
    %400 = vmatprep.subr.mxu0 0.0
    %401 = vmatpush1.msra.mxu0 0.0
    %402 = vmatprep.subr.mxu0 0.0
    %403 = vmatpush1.msra.mxu0 0.0
    %404 = vmatprep.subr.mxu0 0.0
    %405 = vmatpush1.msra.mxu0 0.0
    %406 = vmatprep.subr.mxu0 0.0
    %407 = vmatpush1.msra.mxu0 0.0
    %408 = vmatprep.subr.mxu0 0.0
    %409 = vmatpush1.msra.mxu0 0.0
    %410 = vmatprep.subr.mxu0 0.0
    %411 = vmatpush1.msra.mxu0 0.0
    %412 = vmatprep.subr.mxu0 0.0
    %413 = vmatpush1.msra.mxu0 0.0
    %414 = vmatprep.subr.mxu0 0.0
    %415 = vmatpush1.msra.mxu0 0.0
    %416 = vmatprep.subr.mxu0 0.0
    %417 = vmatpush1.msra.mxu0 0.0
    %418 = vmatprep.subr.mxu0 0.0
    %419 = vmatpush1.msra.mxu0 0.0
    %420 = vmatprep.subr.mxu0 0.0
    %421 = vmatpush1.msra.mxu0 0.0
    %422 = vmatprep.subr.mxu0 0.0
    %423 = vmatpush1.msra.mxu0 0.0
    %424 = vmatprep.subr.mxu0 0.0
    %425 = vmatpush1.msra.mxu0 0.0
    %426 = vmatprep.mubr.f32.mxu0 0.0
    %427 = vmatmul.mubr.f32.gmra.mrb[0].mxu0 %v360
    %v428 = vpop.f32.mrb[0].mxu0
    %v429 = vadd.f32 0.0, %v428
    %v430 = vpop.f32.mrb[0].mxu0
    %431 = vdwg.mxu0
    %v432 = vld [vmem:[#allocation2] sm:$0xff]
    %v433 = vadd.f32 %v432, %v429
    %434 = vst [vmem:[#allocation2] sm:$0xff] %v433
    // Predicated region
    $region22: #{tpu_custom_call.1} parent=1 // pred_check
      _
    $region23: #{tpu_custom_call.1} parent=1 // pred_check_branch
      %436 = sbr.rel (0) target = $region25
    $region24: #{tpu_custom_call.1} parent=1 // pred_region
      %s438 = ssub.s32 128, 128
      %439 = vsyncadd [#allocation3], %s438
      %s441 = sshll.u32 [#allocation2], 4
      %s442 = int_to_ptr.vmem [resolvable:$true] %s441
      %444 = dma.vmem_to_hbm [thread:$0]  %s442, 128, %s4, [#allocation3]
    $region25: #{tpu_custom_call.1} parent=1 // pred_fallthru
      _
    // Predicated region
    $region26: #{tpu_custom_call.1} parent=1 // pred_check
      _
    $region27: #{tpu_custom_call.1} parent=1 // pred_check_branch
      %446 = sbr.rel (0) target = $region29
    $region28: #{tpu_custom_call.1} parent=1 // pred_region
      %447 = dma.done [#allocation3], 128
    $region29: #{tpu_custom_call.1} parent=1 // pred_fallthru
      _
    %448 = vsyncpa [#allocation3], 1

</llo_original>
